<compile_context>
chip_gen: v7x
topology: tpu7x:2x2x1
jax: 0.10.0
libtpu: 0.0.40
codegen_flags: <defaults>
</compile_context>

<pallas_src>
import jax
import jax.numpy as jnp
import numpy as np
from jax.experimental import pallas as pl
from jax.experimental.pallas import tpu as pltpu

# Rows of 128 lanes per block (~512 KiB for f32).  At most 7 live buffers of
# this size (3 specs x 2 pipeline buffers + 1 scratch) stay well under every
# chip's scoped-VMEM default (16 MiB on v5e, 32 MiB on v6e / v7x).
_TR_TARGET = 1024


def _mixup_kernel(lam_ref, x_ref, wrap_ref, o_ref, prev_ref):
    """out[b] = lam * x[b] + (1 - lam) * x[(b - 1) % B], prev carried in VMEM."""
    b = pl.program_id(1)

    # Seed the carry with x[B-1]'s tile at the start of each batch sweep.
    @pl.when(b == 0)
    def _():
        prev_ref[...] = wrap_ref[...]

    lam = lam_ref[0]
    cur = x_ref[...]
    mixed = (lam * cur.astype(jnp.float32)
             + (1.0 - lam) * prev_ref[...].astype(jnp.float32))
    o_ref[...] = mixed.astype(o_ref.dtype)
    # Carry the current element for the next batch step.
    prev_ref[...] = cur


def _mixup_pallas(x3, lam, tr=None):
    """x3: (B, R, 128), lam: (1,) f32 -> (B, R, 128) in x3.dtype."""
    B, R, L = x3.shape
    assert L == 128
    tr = _TR_TARGET if tr is None else tr
    if R <= tr:
        tr = R                       # block equals full dim -> always legal
    else:
        tr = max(8, (tr // 8) * 8)   # sublane dim must be a multiple of 8
    r_tiles = pl.cdiv(R, tr)

    return pl.pallas_call(
        _mixup_kernel,
        out_shape=jax.ShapeDtypeStruct((B, R, L), x3.dtype),
        grid=(r_tiles, B),
        in_specs=[
            pl.BlockSpec(memory_space=pltpu.MemorySpace.SMEM),     # lam scalar
            pl.BlockSpec((1, tr, L), lambda r, b: (b, r, 0)),      # x[b] tile
            # x[B-1] tile: index independent of b, so its DMA only fires when
            # r changes (once per R tile), not per batch step.
            pl.BlockSpec((1, tr, L), lambda r, b: (B - 1, r, 0)),
        ],
        out_specs=pl.BlockSpec((1, tr, L), lambda r, b: (b, r, 0)),
        scratch_shapes=[pltpu.VMEM((1, tr, L), x3.dtype)],
        compiler_params=pltpu.CompilerParams(
            dimension_semantics=("parallel", "arbitrary")),
    )(lam, x3, x3)


def _roll_mix(x, lam, tr=None):
    """Mix an NCHW batch with its roll(1, axis=0) using the Pallas kernel."""
    B = x.shape[0]
    N = int(np.prod(x.shape[1:]))
    x_flat = x.reshape(B, N)
    pad = (-N) % 128
    if pad:
        # TODO(synk): non-128-aligned flattened sizes take a pad + slice round
        # trip through HBM; common image shapes (e.g. 3x224x224) are aligned.
        x_flat = jnp.pad(x_flat, ((0, 0), (0, pad)))
    R = (N + pad) // 128
    out = _mixup_pallas(x_flat.reshape(B, R, 128), lam, tr=tr)
    out = out.reshape(B, R * 128)
    if pad:
        out = out[:, :N]
    return out.reshape(x.shape)


def random_mixup(key, batch_image, batch_mask, *, p=0.5, alpha=1.0):
    """Functional equivalent of RandomMixup.forward (inplace=False)."""
    if batch_image.ndim != 4 or batch_mask.ndim != 4:
        raise ValueError(
            f"Batch ndim should be 4. Got {batch_image.ndim} and {batch_mask.ndim}")
    if not jnp.issubdtype(batch_image.dtype, jnp.floating):
        raise TypeError(
            f"Batch dtype should be a float tensor. Got {batch_image.dtype}.")

    k_apply, k_lam = jax.random.split(key)
    # torch.rand(1).item() >= p  -> return unchanged; else apply mixup.
    apply = jax.random.uniform(k_apply) < p
    # torch._sample_dirichlet([alpha, alpha])[0] == Beta(alpha, alpha) sample.
    lam = jax.random.beta(k_lam, alpha, alpha)
    # On the no-apply path lambda := 1.0 turns the kernel into an identity copy
    # (matches the "return clone" path of the PyTorch module).
    lam_eff = jnp.where(apply, lam, 1.0).astype(jnp.float32).reshape(1)

    mixed_image = _roll_mix(batch_image, lam_eff)
    mixed_mask = _roll_mix(batch_mask, lam_eff)
    return mixed_image, mixed_mask, lam_eff


if __name__ == "__main__":
    key = jax.random.PRNGKey(0)
    k_img, k_msk, k_mix, k_big = jax.random.split(key, 4)

    B, C, H, W = 2, 4, 16, 16
    batch_image = jax.random.normal(k_img, (B, C, H, W), dtype=jnp.float32)
    batch_mask = jax.random.uniform(k_msk, (B, 1, H, W), dtype=jnp.float32)

    img_out, msk_out, lam_eff = random_mixup(
        k_mix, batch_image, batch_mask, p=0.5, alpha=1.0)
    jax.block_until_ready((img_out, msk_out))

    # Pure-JAX reference of the kernel math; output dtype must be preserved.
    assert img_out.dtype == batch_image.dtype
    assert msk_out.dtype == batch_mask.dtype
    lam = lam_eff[0]
    ref_img = lam * batch_image + (1.0 - lam) * jnp.roll(batch_image, 1, axis=0)
    ref_msk = lam * batch_mask + (1.0 - lam) * jnp.roll(batch_mask, 1, axis=0)
    np.testing.assert_allclose(np.asarray(img_out), np.asarray(ref_img),
                               rtol=1e-6, atol=1e-6)
    np.testing.assert_allclose(np.asarray(msk_out), np.asarray(ref_msk),
                               rtol=1e-6, atol=1e-6)

    # Multi-tile R axis with a ragged edge block (tr forced small), f32.
    x_big = jax.random.normal(k_big, (3, 3, 32, 32), dtype=jnp.float32)  # R = 24
    lam_t = jnp.array([0.3], dtype=jnp.float32)
    out_t = _roll_mix(x_big, lam_t, tr=16)                               # tiles: 16 + ragged 8
    ref_t = 0.3 * x_big + 0.7 * jnp.roll(x_big, 1, axis=0)
    np.testing.assert_allclose(np.asarray(out_t), np.asarray(ref_t),
                               rtol=1e-6, atol=1e-6)

    # Native bf16 path: dtype kept through HBM, math in f32 in-register.
    x_bf16 = jax.random.normal(k_big, (2, 4, 16, 16), dtype=jnp.bfloat16)
    out_bf16 = _roll_mix(x_bf16, lam_t)
    assert out_bf16.dtype == jnp.bfloat16
    ref_bf16 = (0.3 * x_bf16.astype(jnp.float32)
                + 0.7 * jnp.roll(x_bf16, 1, axis=0).astype(jnp.float32))
    np.testing.assert_allclose(np.asarray(out_bf16.astype(jnp.float32)),
                               np.asarray(ref_bf16), rtol=2e-2, atol=2e-2)

    print("KERNEL_OK")
</pallas_src>

<mosaic_0001>
module attributes {stable_mosaic.version = 11 : i64} {
  func.func @_mixup_kernel(%arg0: i32, %arg1: i32, %arg2: memref<1xf32, #tpu.memory_space<smem>>, %arg3: memref<1x8x128xf32, #tpu.memory_space<vmem>>, %arg4: memref<1x8x128xf32, #tpu.memory_space<vmem>>, %arg5: memref<1x8x128xf32, #tpu.memory_space<vmem>>, %arg6: memref<1x8x128xf32, #tpu.memory_space<vmem>>) attributes {dimension_semantics = [#tpu.dimension_semantics<parallel>, #tpu.dimension_semantics<arbitrary>], iteration_bounds = array<i64: 1, 2>, scalar_prefetch = 0 : i64, scratch_operands = 1 : i64, tpu.core_type = #tpu.core_type<tc>, window_params = [{transform_indices = @transform_0, window_bounds = array<i64: 1>}, {transform_indices = @transform_1, window_bounds = array<i64: 1, 8, 128>}, {transform_indices = @transform_2, window_bounds = array<i64: 1, 8, 128>}, {transform_indices = @transform_3, window_bounds = array<i64: 1, 8, 128>}]} {
    %c0_i32 = arith.constant 0 : i32
    %0 = arith.cmpi eq, %arg1, %c0_i32 : i32
    %1 = arith.extui %0 : i1 to i32
    %c0_i32_0 = arith.constant 0 : i32
    %2 = arith.cmpi ne, %1, %c0_i32_0 : i32
    scf.if %2 {
      %c0_13 = arith.constant 0 : index
      %c0_14 = arith.constant 0 : index
      %c0_15 = arith.constant 0 : index
      %14 = vector.load %arg4[%c0_13, %c0_14, %c0_15] : memref<1x8x128xf32, #tpu.memory_space<vmem>>, vector<1x8x128xf32>
      %c0_16 = arith.constant 0 : index
      %c0_17 = arith.constant 0 : index
      %c0_18 = arith.constant 0 : index
      %15 = vector.load %arg6[%c0_16, %c0_17, %c0_18] : memref<1x8x128xf32, #tpu.memory_space<vmem>>, vector<1x8x128xf32>
      tpu.vector_store %arg6[%c0_16, %c0_17, %c0_18], %14 {strides = array<i32>} : memref<1x8x128xf32, #tpu.memory_space<vmem>>, vector<1x8x128xf32>,
    } else {
    }
    %c0 = arith.constant 0 : index
    %3 = memref.load %arg2[%c0] : memref<1xf32, #tpu.memory_space<smem>>
    %c0_1 = arith.constant 0 : index
    %c0_2 = arith.constant 0 : index
    %c0_3 = arith.constant 0 : index
    %4 = vector.load %arg3[%c0_1, %c0_2, %c0_3] : memref<1x8x128xf32, #tpu.memory_space<vmem>>, vector<1x8x128xf32>
    %5 = vector.broadcast %3 : f32 to vector<1x8x128xf32>
    %6 = arith.mulf %5, %4 : vector<1x8x128xf32>
    %cst = arith.constant 1.000000e+00 : f32
    %7 = arith.subf %cst, %3 : f32
    %c0_4 = arith.constant 0 : index
    %c0_5 = arith.constant 0 : index
    %c0_6 = arith.constant 0 : index
    %8 = vector.load %arg6[%c0_4, %c0_5, %c0_6] : memref<1x8x128xf32, #tpu.memory_space<vmem>>, vector<1x8x128xf32>
    %9 = vector.broadcast %7 : f32 to vector<1x8x128xf32>
    %10 = arith.mulf %9, %8 : vector<1x8x128xf32>
    %11 = arith.addf %6, %10 : vector<1x8x128xf32>
    %c0_7 = arith.constant 0 : index
    %c0_8 = arith.constant 0 : index
    %c0_9 = arith.constant 0 : index
    %12 = vector.load %arg5[%c0_7, %c0_8, %c0_9] : memref<1x8x128xf32, #tpu.memory_space<vmem>>, vector<1x8x128xf32>
    tpu.vector_store %arg5[%c0_7, %c0_8, %c0_9], %11 {strides = array<i32>} : memref<1x8x128xf32, #tpu.memory_space<vmem>>, vector<1x8x128xf32>,
    %c0_10 = arith.constant 0 : index
    %c0_11 = arith.constant 0 : index
    %c0_12 = arith.constant 0 : index
    %13 = vector.load %arg6[%c0_10, %c0_11, %c0_12] : memref<1x8x128xf32, #tpu.memory_space<vmem>>, vector<1x8x128xf32>
    tpu.vector_store %arg6[%c0_10, %c0_11, %c0_12], %4 {strides = array<i32>} : memref<1x8x128xf32, #tpu.memory_space<vmem>>, vector<1x8x128xf32>,
    return
  }
  func.func @transform_0(%arg0: i32, %arg1: i32) -> i32 {
    %c0_i32 = arith.constant 0 : i32
    %c0_i32_0 = arith.constant 0 : i32
    return %c0_i32 : i32
  }
  func.func @transform_1(%arg0: i32, %arg1: i32) -> (i32, i32, i32) {
    %c0_i32 = arith.constant 0 : i32
    %c0_i32_0 = arith.constant 0 : i32
    return %arg1, %arg0, %c0_i32 : i32, i32, i32
  }
  func.func @transform_2(%arg0: i32, %arg1: i32) -> (i32, i32, i32) {
    %c1_i32 = arith.constant 1 : i32
    %c0_i32 = arith.constant 0 : i32
    %c0_i32_0 = arith.constant 0 : i32
    return %c1_i32, %arg0, %c0_i32 : i32, i32, i32
  }
  func.func @transform_3(%arg0: i32, %arg1: i32) -> (i32, i32, i32) {
    %c0_i32 = arith.constant 0 : i32
    %c0_i32_0 = arith.constant 0 : i32
    return %arg1, %arg0, %c0_i32 : i32, i32, i32
  }
}

</mosaic_0001>

<llo_original>
// kernel: tpu_custom_call.1
$region0: #{tpu_custom_call.1}
  #allocation0 [shape = 'u32[]', space=smem, size = 0x4, offset = 0x4, fixed_abs, tag = 'smem constant byte address 0x4 - core index']
  #allocation1 [shape = 'u32[144,128]{1,0:T(1,128)}', space=vmem, size = 0x12000, scoped, tag = 'internal scratch']
  #allocation2 [shape = 'f32[1,8,128]{2,1,0:T(8,128)}', space=vmem, size = 0x1000, scoped, tag = 'scratch operand']
  #allocation3 [shape = 'f32[1]{0:T(128)S(6)}', space=smem, size = 0x200, scoped, tag = 'scoped memory for tpu_custom_call.1']
  %s0 = inlined_call_operand.<no memory space> [shape: f32[1], index: 0, kind: input, shape index: {}]
  %s1 = inlined_call_operand.hbm [shape: f32[2,8,128], index: 1, kind: input, shape index: {}]
  %s2 = inlined_call_operand.hbm [shape: f32[2,8,128], index: 2, kind: input, shape index: {}]
  %s3 = inlined_call_operand.hbm [shape: f32[2,8,128], index: 3, kind: output, shape index: {}]
  %s4 = sld [smem:[#allocation0]]
  $region57: #{tpu_custom_call.1} parent=0
    _
  %s6 = ssub.s32 1, %s4
  %s7 = scalar_select 0, %s6, %s4
  %8 = sst [smem:[#allocation3]] %s0
  $region1: #{tpu_custom_call.1} parent=0
    #allocation4 [shape = 'u8[8192]{0}', space=vmem, size = 0x2000, scoped, tag = 'input window, operand 1']
    #allocation5 [shape = 's32[2]{0}', space=sflag, size = 0x8, scoped, tag = 'scoped memory for tpu_custom_call.1']
    #allocation6 [shape = 's32[2]{0}', space=sflag, size = 0x8, scoped, tag = 'scoped memory for tpu_custom_call.1']
    #allocation7 [shape = 'u8[4096]{0}', space=vmem, size = 0x1000, scoped, tag = 'input window, operand 2, single buffered']
    #allocation8 [shape = 's32[1]{0}', space=sflag, size = 0x4, scoped, tag = 'scoped memory for tpu_custom_call.1']
    #allocation9 [shape = 'u8[8192]{0}', space=vmem, size = 0x2000, scoped, tag = 'output window, operand 0']
    %9 = vsyncpa [#allocation5], 0
    %s10 = scalar_lea.sflag [#allocation5], 1
    %11 = vsyncpa %s10, 0
    %12 = vsyncpa [#allocation8], 0
    %13 = vsyncpa [#allocation6], 0
    %s14 = scalar_lea.sflag [#allocation6], 1
    %15 = vsyncpa %s14, 0
    loop: start=0, step=1, limit=4
    $region2: #{tpu_custom_call.1} parent=1 // loop_pre_header
      _
    $region3: #{tpu_custom_call.1} parent=1 // loop_header
      %s17 = sphi 0, %s21
      %p18 = scmp.ge.s32.totalorder %s17, 4
      %s24 = sphi 0, %s36
      %s25 = sphi 0, %s32
      %s26 = sphi 0, %s24
      %s27 = sphi 0, %s25
      %s28 = sphi 0, %s26
      %s29 = sphi 0, %s27
      %s37 = sphi 0, %s37
      %s39 = sphi 0, %s37
      %s40 = sphi 0, %s39
      %s54 = sphi 0, %s40
      %s62 = sphi 0, %s64
      %s65 = sphi 0, %s62
      %s66 = sphi 0, %s65
      %s82 = sphi 0, %s66
      %s88 = sphi 0, %s90
      %s91 = sphi 0, %s88
      %s92 = sphi 0, %s91
      %s108 = sphi 0, %s92
      %s116 = sphi 0, %s118
      %s119 = sphi 0, %s116
      %s120 = sphi 0, %s119
      %s136 = sphi 0, %s120
    $region4: #{tpu_custom_call.1} parent=1 // loop_header_branch
      %20 = sbr.rel (%p18) target = $region8
    $region5: #{tpu_custom_call.1} parent=1 // loop_body
      %s22 = ssub.s32 %s17, 1
      %s23 = ssub.s32 %s17, 2
      %s30 = sadd.s32 1, %s25
      %p31 = scmp.ge.s32.totalorder %s30, 2
      %s32 = scalar_select %p31, 0, %s30
      %s33 = sadd.s32 1, %s24
      %s34 = scalar_select %p31, %s33, %s24
      %p35 = scmp.ge.s32.totalorder %s34, 1
      %s36 = scalar_select %p35, 0, %s34
      %s38 = sadd.s32 %s37, 1
      %p41 = scmp.eq.s32.totalorder %s17, 1
      %p42 = scmp.ne.s32.totalorder %s37, %s39
      %p43 = scmp.eq.s32.totalorder %s17, 0
      %p44 = por %p42, %p43
      %p45 = scmp.ne.s32.totalorder %s37, %s39
      %p46 = scmp.eq.s32.totalorder %s22, 1
      %p47 = por %p45, %p46
      %p48 = scmp.ne.s32.totalorder %s39, %s40
      %p49 = scmp.eq.s32.totalorder %s22, 0
      %p50 = por %p48, %p49
      %p51 = scmp.ne.s32.totalorder %s39, %s40
      %p52 = scmp.eq.s32.totalorder %s23, 1
      %p53 = por %p51, %p52
      %p55 = scmp.ne.s32.totalorder %s40, %s54
      %p56 = scmp.eq.s32.totalorder %s23, 0
      %p57 = por %p55, %p56
      %s58 = ssub.s32 %s25, %s32
      %s59 = ssub.s32 %s24, %s36
      %s60 = sor.u32 %s58, %s59
      %p61 = scmp.eq.s32.totalorder %s60, 0
      %s63 = sadd.s32 %s62, 1
      %s64 = scalar_select %p61, %s62, %s63
      %p67 = pneg %p61
      %p68 = scmp.eq.s32.totalorder %s17, 1
      %p69 = por %p67, %p68
      %p70 = scmp.ne.s32.totalorder %s62, %s65
      %p71 = scmp.eq.s32.totalorder %s17, 0
      %p72 = por %p70, %p71
      %p73 = scmp.ne.s32.totalorder %s62, %s65
      %p74 = scmp.eq.s32.totalorder %s22, 1
      %p75 = por %p73, %p74
      %p76 = scmp.ne.s32.totalorder %s65, %s66
      %p77 = scmp.eq.s32.totalorder %s22, 0
      %p78 = por %p76, %p77
      %p79 = scmp.ne.s32.totalorder %s65, %s66
      %p80 = scmp.eq.s32.totalorder %s23, 1
      %p81 = por %p79, %p80
      %p83 = scmp.ne.s32.totalorder %s66, %s82
      %p84 = scmp.eq.s32.totalorder %s23, 0
      %p85 = por %p83, %p84
      %s86 = ssub.s32 %s24, %s36
      %p87 = scmp.eq.s32.totalorder %s86, 0
      %s89 = sadd.s32 %s88, 1
      %s90 = scalar_select %p87, %s88, %s89
      %p93 = pneg %p87
      %p94 = scmp.eq.s32.totalorder %s17, 1
      %p95 = por %p93, %p94
      %p96 = scmp.ne.s32.totalorder %s88, %s91
      %p97 = scmp.eq.s32.totalorder %s17, 0
      %p98 = por %p96, %p97
      %p99 = scmp.ne.s32.totalorder %s88, %s91
      %p100 = scmp.eq.s32.totalorder %s22, 1
      %p101 = por %p99, %p100
      %p102 = scmp.ne.s32.totalorder %s91, %s92
      %p103 = scmp.eq.s32.totalorder %s22, 0
      %p104 = por %p102, %p103
      %p105 = scmp.ne.s32.totalorder %s91, %s92
      %p106 = scmp.eq.s32.totalorder %s23, 1
      %p107 = por %p105, %p106
      %p109 = scmp.ne.s32.totalorder %s92, %s108
      %p110 = scmp.eq.s32.totalorder %s23, 0
      %p111 = por %p109, %p110
      %s112 = ssub.s32 %s25, %s32
      %s113 = ssub.s32 %s24, %s36
      %s114 = sor.u32 %s112, %s113
      %p115 = scmp.eq.s32.totalorder %s114, 0
      %s117 = sadd.s32 %s116, 1
      %s118 = scalar_select %p115, %s116, %s117
      %p121 = pneg %p115
      %p122 = scmp.eq.s32.totalorder %s17, 1
      %p123 = por %p121, %p122
      %p124 = scmp.ne.s32.totalorder %s116, %s119
      %p125 = scmp.eq.s32.totalorder %s17, 0
      %p126 = por %p124, %p125
      %p127 = scmp.ne.s32.totalorder %s116, %s119
      %p128 = scmp.eq.s32.totalorder %s22, 1
      %p129 = por %p127, %p128
      %p130 = scmp.ne.s32.totalorder %s119, %s120
      %p131 = scmp.eq.s32.totalorder %s22, 0
      %p132 = por %p130, %p131
      %p133 = scmp.ne.s32.totalorder %s119, %s120
      %p134 = scmp.eq.s32.totalorder %s23, 1
      %p135 = por %p133, %p134
      %p137 = scmp.ne.s32.totalorder %s120, %s136
      %p138 = scmp.eq.s32.totalorder %s23, 0
      %p139 = por %p137, %p138
      %p140 = scmp.le.s32.totalorder 1, %s17
      %p141 = scmp.lt.s32.totalorder %s17, 3
      %p142 = pnand %p140, %p141
      %p143 = pneg %p142
      // Predicated region
      $region9: #{tpu_custom_call.1} parent=5 // pred_check
        _
      $region10: #{tpu_custom_call.1} parent=5 // pred_check_branch
        %145 = sbr.rel (%p142) target = $region12
      $region11: #{tpu_custom_call.1} parent=5 // pred_region
        %s146 = ssub.s32 %s17, 1
        // Predicated region
        $region13: #{tpu_custom_call.1} parent=11 // pred_check
          %p147 = pneg %p50
        $region14: #{tpu_custom_call.1} parent=11 // pred_check_branch
          %149 = sbr.rel (%p147) target = $region16
        $region15: #{tpu_custom_call.1} parent=11 // pred_region
          _
        $region16: #{tpu_custom_call.1} parent=11 // pred_fallthru
          _
        // Predicated region
        $region17: #{tpu_custom_call.1} parent=11 // pred_check
          %p150 = pneg %p104
        $region18: #{tpu_custom_call.1} parent=11 // pred_check_branch
          %152 = sbr.rel (%p150) target = $region20
        $region19: #{tpu_custom_call.1} parent=11 // pred_region
          %s154 = ssub.s32 128, 128
          %155 = vsyncadd [#allocation8], %s154
          %s156 = sadd.s32 %s26, 1
          %s157 = smul.addr %s156, 128
          %s158 = scalar_lea.hbm %s2, %s157
          %s160 = sshll.u32 [#allocation7], 4
          %s161 = int_to_ptr.vmem [resolvable:$true] %s160
          %163 = dma.hbm_to_vmem [thread:$0]  %s158, 128, %s161, [#allocation8]
        $region20: #{tpu_custom_call.1} parent=11 // pred_fallthru
          _
      $region12: #{tpu_custom_call.1} parent=5 // pred_fallthru
        _
      %p164 = scmp.lt.s32.totalorder %s17, 2
      // Predicated region
      $region21: #{tpu_custom_call.1} parent=5 // pred_check
        %p165 = pneg %p164
      $region22: #{tpu_custom_call.1} parent=5 // pred_check_branch
        %167 = sbr.rel (%p165) target = $region24
      $region23: #{tpu_custom_call.1} parent=5 // pred_region
        // Predicated region
        $region25: #{tpu_custom_call.1} parent=23 // pred_check
          %p168 = pneg %p72
        $region26: #{tpu_custom_call.1} parent=23 // pred_check_branch
          %170 = sbr.rel (%p168) target = $region28
        $region27: #{tpu_custom_call.1} parent=23 // pred_region
          %s171 = sand.u32 %s62, 1
          %s172 = scalar_lea.sflag [#allocation5], %s171
          %s173 = sand.u32 %s62, 1
          %s174 = smul.addr %s173, 8
          %s175 = scalar_lea.vmem [#allocation4], %s174
          %s177 = ssub.s32 128, 128
          %178 = vsyncadd %s172, %s177
          %s179 = sadd.s32 %s24, %s25
          %s180 = smul.addr %s179, 128
          %s181 = scalar_lea.hbm %s1, %s180
          %s183 = sshll.u32 %s175, 4
          %s184 = int_to_ptr.vmem [resolvable:$true] %s183
          %186 = dma.hbm_to_vmem [thread:$0]  %s181, 128, %s184, %s172
        $region28: #{tpu_custom_call.1} parent=23 // pred_fallthru
          _
      $region24: #{tpu_custom_call.1} parent=5 // pred_fallthru
        _
      %p187 = scmp.le.s32.totalorder 1, %s17
      %p188 = scmp.lt.s32.totalorder %s17, 3
      %p189 = pnand %p187, %p188
      %p190 = pneg %p189
      // Predicated region
      $region29: #{tpu_custom_call.1} parent=5 // pred_check
        _
      $region30: #{tpu_custom_call.1} parent=5 // pred_check_branch
        %192 = sbr.rel (%p189) target = $region32
      $region31: #{tpu_custom_call.1} parent=5 // pred_region
        %s193 = ssub.s32 %s17, 1
        %s194 = sand.u32 %s65, 1
        %s195 = scalar_lea.sflag [#allocation5], %s194
        %s196 = sand.u32 %s65, 1
        %s197 = smul.addr %s196, 8
        %s198 = scalar_lea.vmem [#allocation4], %s197
        // Predicated region
        $region33: #{tpu_custom_call.1} parent=31 // pred_check
          %p199 = pneg %p78
        $region34: #{tpu_custom_call.1} parent=31 // pred_check_branch
          %201 = sbr.rel (%p199) target = $region36
        $region35: #{tpu_custom_call.1} parent=31 // pred_region
          %202 = dma.done %s195, 128
        $region36: #{tpu_custom_call.1} parent=31 // pred_fallthru
          _
        // Predicated region
        $region37: #{tpu_custom_call.1} parent=31 // pred_check
          %p203 = pneg %p104
        $region38: #{tpu_custom_call.1} parent=31 // pred_check_branch
          %205 = sbr.rel (%p203) target = $region40
        $region39: #{tpu_custom_call.1} parent=31 // pred_region
          %206 = dma.done [#allocation8], 128
        $region40: #{tpu_custom_call.1} parent=31 // pred_fallthru
          _
        %p207 = pneg %p50
        %p208 = pneg %p47
        %s209 = sand.u32 %s65, 1
        %s210 = scalar_lea.sflag [#allocation5], %s209
        %s211 = sand.u32 %s65, 1
        %s212 = smul.addr %s211, 8
        %s213 = scalar_lea.vmem [#allocation4], %s212
        %p214 = pneg %p78
        %p215 = pneg %p75
        %p216 = pneg %p104
        %p217 = pneg %p101
        %p218 = pneg %p132
        %p219 = pneg %p129
        %s220 = sand.u32 %s119, 1
        %s221 = scalar_lea.sflag [#allocation6], %s220
        %s222 = sand.u32 %s119, 1
        %s223 = smul.addr %s222, 8
        %s224 = scalar_lea.vmem [#allocation9], %s223
        %p225 = scmp.eq.s32.totalorder %s27, 0
        // Predicated region
        $region41: #{tpu_custom_call.1} parent=31 // pred_check
          %p226 = pneg %p225
        $region42: #{tpu_custom_call.1} parent=31 // pred_check_branch
          %228 = sbr.rel (%p226) target = $region44
        $region43: #{tpu_custom_call.1} parent=31 // pred_region
          %v229 = vld [vmem:[#allocation7] sm:$0xff]
          %230 = vst [vmem:[#allocation2] sm:$0xff] %v229
        $region44: #{tpu_custom_call.1} parent=31 // pred_fallthru
          _
        %s231 = sld [smem:[#allocation3]]
        %v232 = vld [vmem:[%s198] sm:$0xff]
        %v233 = vstv %s231
        %v234 = vmul.f32 %v233, %v232
        %s235 = ssub.f32 1.0, %s231
        %v236 = vld [vmem:[#allocation2] sm:$0xff]
        %v237 = vstv %s235
        %v238 = vmul.f32 %v237, %v236
        %v239 = vadd.f32 %v234, %v238
        %240 = vst [vmem:[%s224] sm:$0xff] %v239
        %241 = vst [vmem:[#allocation2] sm:$0xff] %v232
        %s242 = sand.u32 %s119, 1
        %s243 = scalar_lea.sflag [#allocation6], %s242
        %s244 = sand.u32 %s119, 1
        %s245 = smul.addr %s244, 8
        %s246 = scalar_lea.vmem [#allocation9], %s245
        // Predicated region
        $region45: #{tpu_custom_call.1} parent=31 // pred_check
          %p247 = pneg %p129
        $region46: #{tpu_custom_call.1} parent=31 // pred_check_branch
          %249 = sbr.rel (%p247) target = $region48
        $region47: #{tpu_custom_call.1} parent=31 // pred_region
          %s251 = ssub.s32 128, 128
          %252 = vsyncadd %s243, %s251
          %s253 = sadd.s32 %s26, %s27
          %s254 = smul.addr %s253, 128
          %s255 = scalar_lea.hbm %s3, %s254
          %s257 = sshll.u32 %s246, 4
          %s258 = int_to_ptr.vmem [resolvable:$true] %s257
          %260 = dma.vmem_to_hbm [thread:$0]  %s258, 128, %s255, %s243
        $region48: #{tpu_custom_call.1} parent=31 // pred_fallthru
          _
      $region32: #{tpu_custom_call.1} parent=5 // pred_fallthru
        _
      %p261 = scmp.le.s32.totalorder 2, %s17
      // Predicated region
      $region49: #{tpu_custom_call.1} parent=5 // pred_check
        %p262 = pneg %p261
      $region50: #{tpu_custom_call.1} parent=5 // pred_check_branch
        %264 = sbr.rel (%p262) target = $region52
      $region51: #{tpu_custom_call.1} parent=5 // pred_region
        %s265 = ssub.s32 %s17, 2
        // Predicated region
        $region53: #{tpu_custom_call.1} parent=51 // pred_check
          %p266 = pneg %p135
        $region54: #{tpu_custom_call.1} parent=51 // pred_check_branch
          %268 = sbr.rel (%p266) target = $region56
        $region55: #{tpu_custom_call.1} parent=51 // pred_region
          %s269 = sand.u32 %s120, 1
          %s270 = scalar_lea.sflag [#allocation6], %s269
          %s271 = sand.u32 %s120, 1
          %s272 = smul.addr %s271, 8
          %s273 = scalar_lea.vmem [#allocation9], %s272
          %274 = dma.done %s270, 128
        $region56: #{tpu_custom_call.1} parent=51 // pred_fallthru
          _
      $region52: #{tpu_custom_call.1} parent=5 // pred_fallthru
        _
    $region6: #{tpu_custom_call.1} parent=1 // loop_footer
      %s21 = sadd.s32 1, %s17
    $region7: #{tpu_custom_call.1} parent=1 // loop_footer_branch
      %16 = sbr.rel target = $region3
    $region8: #{tpu_custom_call.1} parent=1 // loop_exit
      _
    %275 = vsyncpa [#allocation5], 1
    %s276 = scalar_lea.sflag [#allocation5], 1
    %277 = vsyncpa %s276, 1
    %278 = vsyncpa [#allocation8], 1
    %279 = vsyncpa [#allocation6], 1
    %s280 = scalar_lea.sflag [#allocation6], 1
    %281 = vsyncpa %s280, 1

</llo_original>
